<compile_context>
chip_gen: v6e
topology: v6e:2x2x1
jax: 0.10.0
libtpu: 0.0.40
codegen_flags: <defaults>
</compile_context>

<pallas_src>
import jax
import jax.numpy as jnp
from jax.experimental import pallas as pl
from jax.experimental.pallas import tpu as pltpu


def _unembed_kernel(x_ref, o_ref):
    # x_ref: (tL, C) tile of one batch element (batch dim squeezed)
    # o_ref: (C, tL) tile of the same batch element
    o_ref[...] = x_ref[...].T


def _vmem_budget():
    """Generation-aware (tile_footprint_budget, vmem_limit) in bytes.

    The footprint budget bounds the double-buffered in+out tiles.  Default is
    conservative (safe on v7x's 64 MiB-per-TC VMEM); v5e/v6e (128 MiB) get a
    slightly larger budget.
    """
    tile_budget = 40 * 1024 * 1024
    vmem_limit = 48 * 1024 * 1024
    try:
        cap = getattr(pltpu.get_tpu_info(), "vmem_capacity_bytes", None)
        if cap is not None and int(cap) >= 96 * 1024 * 1024:   # v5e / v6e
            tile_budget = 48 * 1024 * 1024
            vmem_limit = 64 * 1024 * 1024
    except Exception:
        pass
    return tile_budget, vmem_limit


def _tile_plan(B, L, C, itemsize):
    """Return (tL, l_tiles) with L == l_tiles * tL and tL % 128 == 0, keeping
    the double-buffered per-step footprint under the VMEM budget.  Returns
    None when no clean (pad-free, non-degenerate) tiling exists."""
    if L % 128 != 0:
        return None
    tile_budget, _ = _vmem_budget()
    bytes_per_row = 4 * C * itemsize            # (in + out) x double buffering
    max_tl = (tile_budget // bytes_per_row // 128) * 128
    if max_tl < 128:
        return None

    m = L // 128
    k_budget = pl.cdiv(L, max_tl)               # min #tiles to fit VMEM budget
    if k_budget > m:
        return None

    def smallest_exact(k_lo):
        for k in range(k_lo, m + 1):
            if m % k == 0:
                return k
        return None

    # Prefer >= 2 tiles total so v7x's two TensorCores can split the grid,
    # but never at the cost of degenerate tiny tiles.
    want = k_budget if B * k_budget >= 2 else max(k_budget, 2)
    k = smallest_exact(want)
    if k is not None and 128 * (m // k) < 512 and k_budget < want:
        k = smallest_exact(k_budget)
    if k is None:
        return None

    tl = 128 * (m // k)                          # exact: k * tl == L
    # Degenerate split (prime-ish m forcing tiny tiles while bigger ones would
    # fit): let XLA's fused transpose handle it instead.
    if tl < 1024 and tl < min(max_tl, L) // 4:
        return None
    return tl, k


def patch_unembed(x, x_size, embed_dim):
    """x: (B, L, C) with L == x_size[0]*x_size[1], C == embed_dim.
    Returns (B, C, H, W) — identical semantics to the PyTorch module."""
    B, L, C = x.shape
    H, W = x_size
    assert L == H * W and C == embed_dim

    itemsize = jnp.dtype(x.dtype).itemsize
    plan = None
    if itemsize == 4 and L >= 128 and L * C >= 128 * 128:
        plan = _tile_plan(B, L, C, itemsize)

    if plan is None:
        # Ragged / tiny / sub-32-bit-dtype inputs: XLA's fused transpose is
        # at/near roofline here and avoids any pad / slice copies.
        return jnp.swapaxes(x, 1, 2).reshape(B, C, H, W)

    tL, l_tiles = plan
    _, vmem_limit = _vmem_budget()

    out_bcl = pl.pallas_call(
        _unembed_kernel,
        out_shape=jax.ShapeDtypeStruct((B, C, L), x.dtype),
        grid_spec=pltpu.PrefetchScalarGridSpec(
            num_scalar_prefetch=0,
            grid=(B, l_tiles),
            in_specs=[
                # (tL, C) input tile: last dim = full C (any embed_dim OK),
                # sublane dim tL a multiple of 128.
                pl.BlockSpec((pl.Squeezed(), tL, C), lambda b, i: (b, i, 0)),
            ],
            # (C, tL) output tile: lane dim tL multiple of 128 -> unmasked vst,
            # sublane dim = full C.
            out_specs=pl.BlockSpec((pl.Squeezed(), C, tL), lambda b, i: (b, 0, i)),
        ),
        compiler_params=pltpu.CompilerParams(
            dimension_semantics=("parallel", "parallel"),
            vmem_limit_bytes=vmem_limit,
        ),
        cost_estimate=pl.CostEstimate(
            flops=0,
            transcendentals=0,
            bytes_accessed=2 * B * L * C * itemsize,
        ),
    )(x)

    # Pure metadata reshape: (B, C, L) -> (B, C, H, W)
    return out_bcl.reshape(B, C, H, W)


def _reference(x, x_size, embed_dim):
    B, L, C = x.shape
    H, W = x_size
    return jnp.transpose(x, (0, 2, 1)).reshape(B, C, H, W)


if __name__ == "__main__":
    key = jax.random.PRNGKey(0)

    # Case 1: Pallas path, single L-tile per batch element (B=2, 16x16, C=96).
    B, H, W, C = 2, 16, 16, 96
    L = H * W
    x1 = jax.random.normal(key, (B, L, C), dtype=jnp.float32)
    out1 = jax.block_until_ready(patch_unembed(x1, (H, W), embed_dim=C))
    ref1 = _reference(x1, (H, W), C)
    assert out1.shape == (B, C, H, W) and out1.dtype == x1.dtype
    assert jnp.array_equal(out1, ref1), "mismatch (single-tile case)"

    # Case 2: Pallas path with B=1 -> L is split into >=2 tiles (32x32, C=96),
    # exercising the L-dim grid axis (and the v7x 2-TC split).
    H2, W2 = 32, 32
    L2 = H2 * W2
    x2 = jax.random.normal(jax.random.PRNGKey(1), (1, L2, C), dtype=jnp.float32)
    out2 = jax.block_until_ready(patch_unembed(x2, (H2, W2), embed_dim=C))
    ref2 = _reference(x2, (H2, W2), C)
    assert out2.shape == (1, C, H2, W2)
    assert jnp.array_equal(out2, ref2), "mismatch (multi-tile case)"

    # Case 3: ragged L (18x18 -> L=324, not 128-aligned) -> XLA fallback path
    # (no pad / slice copies paid anywhere).
    H3, W3 = 18, 18
    x3 = jax.random.normal(jax.random.PRNGKey(2), (B, H3 * W3, C), dtype=jnp.float32)
    out3 = jax.block_until_ready(patch_unembed(x3, (H3, W3), embed_dim=C))
    ref3 = _reference(x3, (H3, W3), C)
    assert out3.shape == (B, C, H3, W3)
    assert jnp.array_equal(out3, ref3), "mismatch (ragged fallback case)"

    # Case 4: tiny input -> fallback path.
    H4, W4, C4 = 8, 8, 32
    x4 = jax.random.normal(jax.random.PRNGKey(3), (B, H4 * W4, C4), dtype=jnp.float32)
    out4 = jax.block_until_ready(patch_unembed(x4, (H4, W4), embed_dim=C4))
    ref4 = _reference(x4, (H4, W4), C4)
    assert jnp.array_equal(out4, ref4), "mismatch (tiny fallback case)"

    # Case 5: bf16 input -> fallback path (packed transpose not yet verified).
    x5 = jax.random.normal(jax.random.PRNGKey(4), (B, L, C), dtype=jnp.bfloat16)
    out5 = jax.block_until_ready(patch_unembed(x5, (H, W), embed_dim=C))
    ref5 = _reference(x5, (H, W), C)
    assert jnp.array_equal(out5, ref5), "mismatch (bf16 fallback case)"

    print("KERNEL_OK")
</pallas_src>

<mosaic_0001>
module attributes {stable_mosaic.version = 11 : i64} {
  func.func @_unembed_kernel(%arg0: i32, %arg1: i32, %arg2: memref<1x256x96xf32, #tpu.memory_space<vmem>>, %arg3: memref<1x96x256xf32, #tpu.memory_space<vmem>>) attributes {dimension_semantics = [#tpu.dimension_semantics<parallel>, #tpu.dimension_semantics<parallel>], iteration_bounds = array<i64: 2, 1>, scalar_prefetch = 0 : i64, scratch_operands = 0 : i64, tpu.core_type = #tpu.core_type<tc>, window_params = [{transform_indices = @transform_0, window_bounds = array<i64: 1, 256, 96>}, {transform_indices = @transform_1, window_bounds = array<i64: 1, 96, 256>}]} {
    %c0 = arith.constant 0 : index
    %c0_0 = arith.constant 0 : index
    %c0_1 = arith.constant 0 : index
    %0 = vector.load %arg2[%c0, %c0_0, %c0_1] : memref<1x256x96xf32, #tpu.memory_space<vmem>>, vector<1x256x96xf32>
    %1 = vector.shape_cast %0 : vector<1x256x96xf32> to vector<256x96xf32>
    %2 = tpu.transpose %1, [1, 0] : vector<256x96xf32> -> vector<96x256xf32>
    %c0_2 = arith.constant 0 : index
    %c0_3 = arith.constant 0 : index
    %c0_4 = arith.constant 0 : index
    %3 = vector.load %arg3[%c0_2, %c0_3, %c0_4] : memref<1x96x256xf32, #tpu.memory_space<vmem>>, vector<1x96x256xf32>
    %4 = vector.shape_cast %3 : vector<1x96x256xf32> to vector<96x256xf32>
    %5 = vector.shape_cast %2 : vector<96x256xf32> to vector<1x96x256xf32>
    tpu.vector_store %arg3[%c0_2, %c0_3, %c0_4], %5 {strides = array<i32>} : memref<1x96x256xf32, #tpu.memory_space<vmem>>, vector<1x96x256xf32>,
    return
  }
  func.func @transform_0(%arg0: i32, %arg1: i32) -> (i32, i32, i32) {
    %c0_i32 = arith.constant 0 : i32
    %c0_i32_0 = arith.constant 0 : i32
    return %arg0, %arg1, %c0_i32 : i32, i32, i32
  }
  func.func @transform_1(%arg0: i32, %arg1: i32) -> (i32, i32, i32) {
    %c0_i32 = arith.constant 0 : i32
    %c0_i32_0 = arith.constant 0 : i32
    return %arg0, %c0_i32, %arg1 : i32, i32, i32
  }
}

</mosaic_0001>

<llo_original>
// kernel: tpu_custom_call.1
$region0: #{tpu_custom_call.1}
  #allocation0 [shape = 'u32[]', space=smem, size = 0x4, offset = 0x4, fixed_abs, tag = 'smem constant byte address 0x4 - core index']
  #allocation1 [shape = 'u32[144,128]{1,0:T(1,128)}', space=vmem, size = 0x12000, scoped, tag = 'internal scratch']
  %s0 = inlined_call_operand.vmem [shape: f32[2,256,96], index: 0, kind: input, shape index: {}]
  %s1 = inlined_call_operand.hbm [shape: f32[2,96,256], index: 1, kind: output, shape index: {}]
  %s2 = sld [smem:[#allocation0]]
  $region37: #{tpu_custom_call.1} parent=0
    _
  %s4 = ssub.s32 1, %s2
  %s5 = scalar_select 0, %s4, %s2
  $region1: #{tpu_custom_call.1} parent=0
    #allocation2 [shape = 'u8[196608]{0}', space=vmem, size = 0x30000, scoped, tag = 'output window, operand 0']
    #allocation3 [shape = 's32[2]{0}', space=sflag, size = 0x8, scoped, tag = 'scoped memory for tpu_custom_call.1']
    %6 = vsyncpa [#allocation3], 0
    %s7 = scalar_lea.sflag [#allocation3], 1
    %8 = vsyncpa %s7, 0
    loop: start=0, step=1, limit=4
    $region2: #{tpu_custom_call.1} parent=1 // loop_pre_header
      _
    $region3: #{tpu_custom_call.1} parent=1 // loop_header
      %s10 = sphi 0, %s14
      %p11 = scmp.ge.s32.totalorder %s10, 4
      %s17 = sphi 0, %s29
      %s18 = sphi 0, %s25
      %s19 = sphi 0, %s17
      %s20 = sphi 0, %s18
      %s21 = sphi 0, %s19
      %s22 = sphi 0, %s20
      %s34 = sphi 0, %s36
      %s37 = sphi 0, %s34
      %s38 = sphi 0, %s37
      %s54 = sphi 0, %s38
      %s62 = sphi 0, %s64
      %s65 = sphi 0, %s62
      %s66 = sphi 0, %s65
      %s82 = sphi 0, %s66
    $region4: #{tpu_custom_call.1} parent=1 // loop_header_branch
      %13 = sbr.rel (%p11) target = $region8
    $region5: #{tpu_custom_call.1} parent=1 // loop_body
      %s15 = ssub.s32 %s10, 1
      %s16 = ssub.s32 %s10, 2
      %s23 = sadd.s32 1, %s18
      %p24 = scmp.ge.s32.totalorder %s23, 1
      %s25 = scalar_select %p24, 0, %s23
      %s26 = sadd.s32 1, %s17
      %s27 = scalar_select %p24, %s26, %s17
      %p28 = scmp.ge.s32.totalorder %s27, 2
      %s29 = scalar_select %p28, 0, %s27
      %s30 = ssub.s32 %s17, %s29
      %s31 = ssub.s32 %s18, %s25
      %s32 = sor.u32 %s30, %s31
      %p33 = scmp.eq.s32.totalorder %s32, 0
      %s35 = sadd.s32 %s34, 1
      %s36 = scalar_select %p33, %s34, %s35
      %p39 = pneg %p33
      %p40 = scmp.eq.s32.totalorder %s10, 1
      %p41 = por %p39, %p40
      %p42 = scmp.ne.s32.totalorder %s34, %s37
      %p43 = scmp.eq.s32.totalorder %s10, 0
      %p44 = por %p42, %p43
      %p45 = scmp.ne.s32.totalorder %s34, %s37
      %p46 = scmp.eq.s32.totalorder %s15, 1
      %p47 = por %p45, %p46
      %p48 = scmp.ne.s32.totalorder %s37, %s38
      %p49 = scmp.eq.s32.totalorder %s15, 0
      %p50 = por %p48, %p49
      %p51 = scmp.ne.s32.totalorder %s37, %s38
      %p52 = scmp.eq.s32.totalorder %s16, 1
      %p53 = por %p51, %p52
      %p55 = scmp.ne.s32.totalorder %s38, %s54
      %p56 = scmp.eq.s32.totalorder %s16, 0
      %p57 = por %p55, %p56
      %s58 = ssub.s32 %s17, %s29
      %s59 = ssub.s32 %s18, %s25
      %s60 = sor.u32 %s58, %s59
      %p61 = scmp.eq.s32.totalorder %s60, 0
      %s63 = sadd.s32 %s62, 1
      %s64 = scalar_select %p61, %s62, %s63
      %p67 = pneg %p61
      %p68 = scmp.eq.s32.totalorder %s10, 1
      %p69 = por %p67, %p68
      %p70 = scmp.ne.s32.totalorder %s62, %s65
      %p71 = scmp.eq.s32.totalorder %s10, 0
      %p72 = por %p70, %p71
      %p73 = scmp.ne.s32.totalorder %s62, %s65
      %p74 = scmp.eq.s32.totalorder %s15, 1
      %p75 = por %p73, %p74
      %p76 = scmp.ne.s32.totalorder %s65, %s66
      %p77 = scmp.eq.s32.totalorder %s15, 0
      %p78 = por %p76, %p77
      %p79 = scmp.ne.s32.totalorder %s65, %s66
      %p80 = scmp.eq.s32.totalorder %s16, 1
      %p81 = por %p79, %p80
      %p83 = scmp.ne.s32.totalorder %s66, %s82
      %p84 = scmp.eq.s32.totalorder %s16, 0
      %p85 = por %p83, %p84
      %p86 = scmp.le.s32.totalorder 1, %s10
      %p87 = scmp.lt.s32.totalorder %s10, 3
      %p88 = pnand %p86, %p87
      %p89 = pneg %p88
      // Predicated region
      $region9: #{tpu_custom_call.1} parent=5 // pred_check
        _
      $region10: #{tpu_custom_call.1} parent=5 // pred_check_branch
        %91 = sbr.rel (%p88) target = $region12
      $region11: #{tpu_custom_call.1} parent=5 // pred_region
        %s92 = ssub.s32 %s10, 1
      $region12: #{tpu_custom_call.1} parent=5 // pred_fallthru
        _
      %p93 = scmp.lt.s32.totalorder %s10, 2
      // Predicated region
      $region13: #{tpu_custom_call.1} parent=5 // pred_check
        %p94 = pneg %p93
      $region14: #{tpu_custom_call.1} parent=5 // pred_check_branch
        %96 = sbr.rel (%p94) target = $region16
      $region15: #{tpu_custom_call.1} parent=5 // pred_region
        // Predicated region
        $region17: #{tpu_custom_call.1} parent=15 // pred_check
          %p97 = pneg %p44
        $region18: #{tpu_custom_call.1} parent=15 // pred_check_branch
          %99 = sbr.rel (%p97) target = $region20
        $region19: #{tpu_custom_call.1} parent=15 // pred_region
          %s100 = smul.u32 32, %s18
          %p101 = scmp.lt.s32.totalorder %s17, 1
          %s102 = scalar_select %p101, %s17, 1
          %p103 = scmp.lt.s32.totalorder %s100, 31
          %s104 = scalar_select %p103, %s100, 31
          %s105 = smul.addr %s102, 32
          %s106 = sadd.s32 %s104, %s105
          %s107 = smul.addr %s106, 8
          %s108 = scalar_lea.vmem %s0, %s107
          %s109 = smul.u32 32, %s18
        $region20: #{tpu_custom_call.1} parent=15 // pred_fallthru
          _
      $region16: #{tpu_custom_call.1} parent=5 // pred_fallthru
        _
      %p110 = scmp.le.s32.totalorder 1, %s10
      %p111 = scmp.lt.s32.totalorder %s10, 3
      %p112 = pnand %p110, %p111
      %p113 = pneg %p112
      // Predicated region
      $region21: #{tpu_custom_call.1} parent=5 // pred_check
        _
      $region22: #{tpu_custom_call.1} parent=5 // pred_check_branch
        %115 = sbr.rel (%p112) target = $region24
      $region23: #{tpu_custom_call.1} parent=5 // pred_region
        %s116 = ssub.s32 %s10, 1
        %s117 = smul.u32 32, %s20
        %p118 = scmp.lt.s32.totalorder %s19, 1
        %s119 = scalar_select %p118, %s19, 1
        %p120 = scmp.lt.s32.totalorder %s117, 31
        %s121 = scalar_select %p120, %s117, 31
        %s122 = smul.addr %s119, 32
        %s123 = sadd.s32 %s121, %s122
        %s124 = smul.addr %s123, 8
        %s125 = scalar_lea.vmem %s0, %s124
        %p126 = pneg %p50
        %p127 = pneg %p47
        %p128 = pneg %p78
        %p129 = pneg %p75
        %s130 = sand.u32 %s65, 1
        %s131 = scalar_lea.sflag [#allocation3], %s130
        %s132 = sand.u32 %s65, 1
        %s133 = smul.addr %s132, 192
        %s134 = scalar_lea.vmem [#allocation2], %s133
        %s135 = smul.u32 32, %s20
        %p136 = scmp.lt.s32.totalorder %s19, 1
        %s137 = scalar_select %p136, %s19, 1
        %p138 = scmp.lt.s32.totalorder %s135, 31
        %s139 = scalar_select %p138, %s135, 31
        %s140 = smul.addr %s137, 32
        %s141 = sadd.s32 %s139, %s140
        %s142 = smul.addr %s141, 8
        %s143 = scalar_lea.vmem %s0, %s142
        %s144 = smul.u32 32, %s20
        %s145 = smul.u32 2, %s20
        %v146 = vld [vmem:[%s143] sm:$0xff]
        %v147 = vld [vmem:[%s143 + $0x8] sm:$0xff]
        %v148 = vld [vmem:[%s143 + $0x10] sm:$0xff]
        %v149 = vld [vmem:[%s143 + $0x18] sm:$0xff]
        %v150 = vld [vmem:[%s143 + $0x20] sm:$0xff]
        %v151 = vld [vmem:[%s143 + $0x28] sm:$0xff]
        %v152 = vld [vmem:[%s143 + $0x30] sm:$0xff]
        %v153 = vld [vmem:[%s143 + $0x38] sm:$0xff]
        %v154 = vld [vmem:[%s143 + $0x40] sm:$0xff]
        %v155 = vld [vmem:[%s143 + $0x48] sm:$0xff]
        %v156 = vld [vmem:[%s143 + $0x50] sm:$0xff]
        %v157 = vld [vmem:[%s143 + $0x58] sm:$0xff]
        %v158 = vld [vmem:[%s143 + $0x60] sm:$0xff]
        %v159 = vld [vmem:[%s143 + $0x68] sm:$0xff]
        %v160 = vld [vmem:[%s143 + $0x70] sm:$0xff]
        %v161 = vld [vmem:[%s143 + $0x78] sm:$0xff]
        %v162 = vld [vmem:[%s143 + $0x80] sm:$0xff]
        %v163 = vld [vmem:[%s143 + $0x88] sm:$0xff]
        %v164 = vld [vmem:[%s143 + $0x90] sm:$0xff]
        %v165 = vld [vmem:[%s143 + $0x98] sm:$0xff]
        %v166 = vld [vmem:[%s143 + $0xa0] sm:$0xff]
        %v167 = vld [vmem:[%s143 + $0xa8] sm:$0xff]
        %v168 = vld [vmem:[%s143 + $0xb0] sm:$0xff]
        %v169 = vld [vmem:[%s143 + $0xb8] sm:$0xff]
        %v170 = vld [vmem:[%s143 + $0xc0] sm:$0xff]
        %v171 = vld [vmem:[%s143 + $0xc8] sm:$0xff]
        %v172 = vld [vmem:[%s143 + $0xd0] sm:$0xff]
        %v173 = vld [vmem:[%s143 + $0xd8] sm:$0xff]
        %v174 = vld [vmem:[%s143 + $0xe0] sm:$0xff]
        %v175 = vld [vmem:[%s143 + $0xe8] sm:$0xff]
        %v176 = vld [vmem:[%s143 + $0xf0] sm:$0xff]
        %v177 = vld [vmem:[%s143 + $0xf8] sm:$0xff]
        %178 = vxpose.xlu0.b32.start [1/16] %v146, 128
        %179 = vxpose.xlu0.b32.cont [2/16] %v147, 128
        %180 = vxpose.xlu0.b32.cont [3/16] %v148, 128
        %181 = vxpose.xlu0.b32.cont [4/16] %v149, 128
        %182 = vxpose.xlu0.b32.cont [5/16] %v150, 128
        %183 = vxpose.xlu0.b32.cont [6/16] %v151, 128
        %184 = vxpose.xlu0.b32.cont [7/16] %v152, 128
        %185 = vxpose.xlu0.b32.cont [8/16] %v153, 128
        %186 = vxpose.xlu0.b32.cont [9/16] %v154, 128
        %187 = vxpose.xlu0.b32.cont [10/16] %v155, 128
        %188 = vxpose.xlu0.b32.cont [11/16] %v156, 128
        %189 = vxpose.xlu0.b32.cont [12/16] %v157, 128
        %190 = vxpose.xlu0.b32.cont [13/16] %v158, 128
        %191 = vxpose.xlu0.b32.cont [14/16] %v159, 128
        %192 = vxpose.xlu0.b32.cont [15/16] %v160, 128
        %193 = vxpose.xlu0.b32.end [16/16] %v161, 128
        %v194 = vpop.trf.xlu0
        %v195 = vpop.trf.xlu0
        %v196 = vpop.trf.xlu0
        %v197 = vpop.trf.xlu0
        %v198 = vpop.trf.xlu0
        %v199 = vpop.trf.xlu0
        %v200 = vpop.trf.xlu0
        %v201 = vpop.trf.xlu0
        %v202 = vpop.trf.xlu0
        %v203 = vpop.trf.xlu0
        %v204 = vpop.trf.xlu0
        %v205 = vpop.trf.xlu0
        %v206 = vpop.trf.xlu0
        %v207 = vpop.trf.xlu0
        %v208 = vpop.trf.xlu0
        %v209 = vpop.trf.xlu0
        %210 = vxpose.xlu0.b32.start [1/16] %v162, 128
        %211 = vxpose.xlu0.b32.cont [2/16] %v163, 128
        %212 = vxpose.xlu0.b32.cont [3/16] %v164, 128
        %213 = vxpose.xlu0.b32.cont [4/16] %v165, 128
        %214 = vxpose.xlu0.b32.cont [5/16] %v166, 128
        %215 = vxpose.xlu0.b32.cont [6/16] %v167, 128
        %216 = vxpose.xlu0.b32.cont [7/16] %v168, 128
        %217 = vxpose.xlu0.b32.cont [8/16] %v169, 128
        %218 = vxpose.xlu0.b32.cont [9/16] %v170, 128
        %219 = vxpose.xlu0.b32.cont [10/16] %v171, 128
        %220 = vxpose.xlu0.b32.cont [11/16] %v172, 128
        %221 = vxpose.xlu0.b32.cont [12/16] %v173, 128
        %222 = vxpose.xlu0.b32.cont [13/16] %v174, 128
        %223 = vxpose.xlu0.b32.cont [14/16] %v175, 128
        %224 = vxpose.xlu0.b32.cont [15/16] %v176, 128
        %225 = vxpose.xlu0.b32.end [16/16] %v177, 128
        %v226 = vpop.trf.xlu0
        %v227 = vpop.trf.xlu0
        %v228 = vpop.trf.xlu0
        %v229 = vpop.trf.xlu0
        %v230 = vpop.trf.xlu0
        %v231 = vpop.trf.xlu0
        %v232 = vpop.trf.xlu0
        %v233 = vpop.trf.xlu0
        %v234 = vpop.trf.xlu0
        %v235 = vpop.trf.xlu0
        %v236 = vpop.trf.xlu0
        %v237 = vpop.trf.xlu0
        %v238 = vpop.trf.xlu0
        %v239 = vpop.trf.xlu0
        %v240 = vpop.trf.xlu0
        %v241 = vpop.trf.xlu0
        %242 = vst [vmem:[%s134] sm:$0xff] %v194
        %243 = vst [vmem:[%s134 + $0x8] sm:$0xff] %v226
        %244 = vst [vmem:[%s134 + $0x10] sm:$0xff] %v195
        %245 = vst [vmem:[%s134 + $0x18] sm:$0xff] %v227
        %246 = vst [vmem:[%s134 + $0x20] sm:$0xff] %v196
        %247 = vst [vmem:[%s134 + $0x28] sm:$0xff] %v228
        %248 = vst [vmem:[%s134 + $0x30] sm:$0xff] %v197
        %249 = vst [vmem:[%s134 + $0x38] sm:$0xff] %v229
        %250 = vst [vmem:[%s134 + $0x40] sm:$0xff] %v198
        %251 = vst [vmem:[%s134 + $0x48] sm:$0xff] %v230
        %252 = vst [vmem:[%s134 + $0x50] sm:$0xff] %v199
        %253 = vst [vmem:[%s134 + $0x58] sm:$0xff] %v231
        %254 = vst [vmem:[%s134 + $0x60] sm:$0xff] %v200
        %255 = vst [vmem:[%s134 + $0x68] sm:$0xff] %v232
        %256 = vst [vmem:[%s134 + $0x70] sm:$0xff] %v201
        %257 = vst [vmem:[%s134 + $0x78] sm:$0xff] %v233
        %258 = vst [vmem:[%s134 + $0x80] sm:$0xff] %v202
        %259 = vst [vmem:[%s134 + $0x88] sm:$0xff] %v234
        %260 = vst [vmem:[%s134 + $0x90] sm:$0xff] %v203
        %261 = vst [vmem:[%s134 + $0x98] sm:$0xff] %v235
        %262 = vst [vmem:[%s134 + $0xa0] sm:$0xff] %v204
        %263 = vst [vmem:[%s134 + $0xa8] sm:$0xff] %v236
        %264 = vst [vmem:[%s134 + $0xb0] sm:$0xff] %v205
        %265 = vst [vmem:[%s134 + $0xb8] sm:$0xff] %v237
        %s266 = sand.u32 %s65, 1
        %s267 = scalar_lea.sflag [#allocation3], %s266
        %s268 = sand.u32 %s65, 1
        %s269 = smul.addr %s268, 192
        %s270 = scalar_lea.vmem [#allocation2], %s269
        // Predicated region
        $region25: #{tpu_custom_call.1} parent=23 // pred_check
          %p271 = pneg %p75
        $region26: #{tpu_custom_call.1} parent=23 // pred_check_branch
          %273 = sbr.rel (%p271) target = $region28
        $region27: #{tpu_custom_call.1} parent=23 // pred_region
          %s274 = smul.u32 2, %s20
          %s276 = ssub.s32 3072, 3072
          %277 = vsyncadd %s267, %s276
          %s278 = smul.addr %s19, 24
          %s279 = sadd.s32 %s274, %s278
          %s280 = smul.addr %s279, 128
          %s281 = scalar_lea.hbm %s1, %s280
          %s282 = sshll.u32 %s270, 4
          %s283 = int_to_ptr.vmem [resolvable:$true] %s282
          %288 = dma.vmem_to_hbm [thread:$0]  %s283, 3072, %s281, %s267, 256, 256, 16
        $region28: #{tpu_custom_call.1} parent=23 // pred_fallthru
          _
      $region24: #{tpu_custom_call.1} parent=5 // pred_fallthru
        _
      %p289 = scmp.le.s32.totalorder 2, %s10
      // Predicated region
      $region29: #{tpu_custom_call.1} parent=5 // pred_check
        %p290 = pneg %p289
      $region30: #{tpu_custom_call.1} parent=5 // pred_check_branch
        %292 = sbr.rel (%p290) target = $region32
      $region31: #{tpu_custom_call.1} parent=5 // pred_region
        %s293 = ssub.s32 %s10, 2
        // Predicated region
        $region33: #{tpu_custom_call.1} parent=31 // pred_check
          %p294 = pneg %p81
        $region34: #{tpu_custom_call.1} parent=31 // pred_check_branch
          %296 = sbr.rel (%p294) target = $region36
        $region35: #{tpu_custom_call.1} parent=31 // pred_region
          %s297 = sand.u32 %s66, 1
          %s298 = scalar_lea.sflag [#allocation3], %s297
          %s299 = sand.u32 %s66, 1
          %s300 = smul.addr %s299, 192
          %s301 = scalar_lea.vmem [#allocation2], %s300
          %302 = dma.done %s298, 3072
        $region36: #{tpu_custom_call.1} parent=31 // pred_fallthru
          _
      $region32: #{tpu_custom_call.1} parent=5 // pred_fallthru
        _
    $region6: #{tpu_custom_call.1} parent=1 // loop_footer
      %s14 = sadd.s32 1, %s10
    $region7: #{tpu_custom_call.1} parent=1 // loop_footer_branch
      %9 = sbr.rel target = $region3
    $region8: #{tpu_custom_call.1} parent=1 // loop_exit
      _
    %303 = vsyncpa [#allocation3], 1
    %s304 = scalar_lea.sflag [#allocation3], 1
    %305 = vsyncpa %s304, 1

</llo_original>
